<compile_context>
chip_gen: v7x
topology: tpu7x:2x2x1
jax: 0.10.0
libtpu: 0.0.40
codegen_flags: <defaults>
</compile_context>

<pallas_src>
import jax
import jax.numpy as jnp
from jax.experimental import pallas as pl
from jax.experimental.pallas import tpu as pltpu


def conv_block_1d_kernel(x_ref, w_ref, g_ref, be_ref, out_ref):
    # x_ref : (N, Cin, L)   f32
    # w_ref : (Cout, 3*Cin) bf16  (taps stacked along K in the wrapper)
    # g_ref : (Cout, 1)     f32   BatchNorm gamma
    # be_ref: (Cout, 1)     f32   BatchNorm beta
    # out   : (N, Cout, L)  f32
    N, Cin, L = x_ref.shape
    Cout = w_ref.shape[0]
    eps = 1e-5

    # ---- conv: one stacked-tap matmul per sample (K = 3*Cin), bf16 in / f32 acc ----
    # Running per-channel sum / sum-of-squares for single-pass BN statistics.
    acc = []
    tot = jnp.zeros((Cout, 1), jnp.float32)
    tot_sq = jnp.zeros((Cout, 1), jnp.float32)
    for n in range(N):  # N is tiny and static; unrolled at trace time
        xn = x_ref[n].astype(jnp.bfloat16)                      # (Cin, L) bf16
        zc = jnp.zeros((Cin, 1), jnp.bfloat16)
        x_m1 = jnp.concatenate([zc, xn[:, :L - 1]], axis=1)     # tap k=0 -> x[l-1]
        x_p1 = jnp.concatenate([xn[:, 1:], zc], axis=1)         # tap k=2 -> x[l+1]
        slab = jnp.concatenate([x_m1, xn, x_p1], axis=0)        # (3*Cin, L) bf16
        a = jnp.dot(w_ref[...], slab,
                    preferred_element_type=jnp.float32)          # (Cout, L) f32
        acc.append(a)
        tot = tot + a.sum(axis=1, keepdims=True)
        tot_sq = tot_sq + (a * a).sum(axis=1, keepdims=True)
    # NOTE: conv bias is intentionally omitted — it is exactly cancelled by the
    # training-mode BatchNorm mean subtraction below.

    # ---- training-mode BatchNorm1d (biased stats over N*L), folded to scale/shift ----
    inv_m = 1.0 / float(N * L)
    mean = tot * inv_m                                           # (Cout, 1)
    var = jnp.maximum(tot_sq * inv_m - mean * mean, 0.0)         # (Cout, 1)

    scale = g_ref[...] * jax.lax.rsqrt(var + eps)                # (Cout, 1)
    shift = be_ref[...] - mean * scale

    # ---- single FMA + ReLU epilogue, written directly in NCL layout ----
    for n in range(N):
        out_ref[n] = jnp.maximum(acc[n] * scale + shift, 0.0)


def conv_block_1d(x, p):
    """x: (N, Cin, L) f32 -> (N, Cout, L) f32, matching ConvBlock1D.forward (train mode)."""
    N, Cin, L = x.shape
    Cout = p["w"].shape[0]

    # PyTorch Conv1d weight is (Cout, Cin, 3); stack taps along K so that
    # w_s[o, k*Cin + ci] = w[o, ci, k]  (matches the in-kernel slab order).
    w_s = jnp.transpose(p["w"], (0, 2, 1)).reshape(Cout, 3 * Cin).astype(jnp.bfloat16)

    def col(v):
        return v.reshape(-1, 1).astype(jnp.float32)

    return pl.pallas_call(
        conv_block_1d_kernel,
        out_shape=jax.ShapeDtypeStruct((N, Cout, L), jnp.float32),
        in_specs=[pl.BlockSpec(memory_space=pltpu.MemorySpace.VMEM)] * 4,
        out_specs=pl.BlockSpec(memory_space=pltpu.MemorySpace.VMEM),
    )(x, w_s, col(p["g"]), col(p["be"]))


def init_params(key, cin, cout):
    ks = jax.random.split(key, 4)
    return {
        "w": 0.1 * jax.random.normal(ks[0], (cout, cin, 3), jnp.float32),
        "b": 0.05 * jax.random.normal(ks[1], (cout,), jnp.float32),
        # BatchNorm affine params (PyTorch init gamma=1, beta=0; perturbed for a nontrivial test)
        "g": 1.0 + 0.1 * jax.random.normal(ks[2], (cout,), jnp.float32),
        "be": 0.1 * jax.random.normal(ks[3], (cout,), jnp.float32),
    }


def ref_conv_block_1d(x, p, eps=1e-5):
    """Pure-JAX f32 reference matching the PyTorch forward (training-mode BN)."""
    y = jax.lax.conv_general_dilated(
        x, p["w"], window_strides=(1,), padding=[(1, 1)],
        dimension_numbers=("NCH", "OIH", "NCH"),
        precision=jax.lax.Precision.HIGHEST)
    y = y + p["b"][None, :, None]
    mean = jnp.mean(y, axis=(0, 2), keepdims=True)
    var = jnp.mean((y - mean) ** 2, axis=(0, 2), keepdims=True)
    yn = (y - mean) * jax.lax.rsqrt(var + eps)
    return jnp.maximum(yn * p["g"][None, :, None] + p["be"][None, :, None], 0.0)


if __name__ == "__main__":
    key = jax.random.PRNGKey(0)
    kx, kp = jax.random.split(key)

    N, Cin, Cout, L = 2, 4, 8, 16
    x = jax.random.normal(kx, (N, Cin, L), jnp.float32)
    params = init_params(kp, Cin, Cout)

    out = jax.block_until_ready(conv_block_1d(x, params))
    ref = ref_conv_block_1d(x, params)

    assert out.shape == (N, Cout, L)
    err = float(jnp.max(jnp.abs(out - ref)))
    # bf16 matmul operands with f32 accumulation -> a few 1e-3..1e-2 of absolute error
    # after BN normalization; 5e-2 still catches any layout/indexing bug (O(1) errors).
    assert err < 5e-2, f"max abs err = {err}"

    print("KERNEL_OK")
</pallas_src>

<mosaic_0001>
module attributes {stable_mosaic.version = 11 : i64} {
  func.func @conv_block_1d_kernel(%arg0: memref<2x4x16xf32, #tpu.memory_space<vmem>>, %arg1: memref<8x12xbf16, #tpu.memory_space<vmem>>, %arg2: memref<8x1xf32, #tpu.memory_space<vmem>>, %arg3: memref<8x1xf32, #tpu.memory_space<vmem>>, %arg4: memref<2x8x16xf32, #tpu.memory_space<vmem>>) attributes {dimension_semantics = [], scalar_prefetch = 0 : i64, scratch_operands = 0 : i64, tpu.core_type = #tpu.core_type<tc>} {
    %cst = arith.constant 0.000000e+00 : f32
    %0 = vector.broadcast %cst : f32 to vector<8x1xf32>
    %cst_0 = arith.constant 0.000000e+00 : f32
    %1 = vector.broadcast %cst_0 : f32 to vector<8x1xf32>
    %c0 = arith.constant 0 : index
    %c0_1 = arith.constant 0 : index
    %c0_2 = arith.constant 0 : index
    %2 = vector.load %arg0[%c0, %c0_1, %c0_2] : memref<2x4x16xf32, #tpu.memory_space<vmem>>, vector<1x4x16xf32>
    %3 = vector.shape_cast %2 : vector<1x4x16xf32> to vector<4x16xf32>
    %4 = arith.truncf %3 : vector<4x16xf32> to vector<4x16xbf16>
    %cst_3 = arith.constant 0.000000e+00 : bf16
    %5 = vector.broadcast %cst_3 : bf16 to vector<4x1xbf16>
    %6 = vector.extract_strided_slice %4 {offsets = [0, 0], sizes = [4, 15], strides = [1, 1]} : vector<4x16xbf16> to vector<4x15xbf16>
    %7 = tpu.concatenate %5, %6 in 1 : vector<4x1xbf16>, vector<4x15xbf16> -> vector<4x16xbf16>
    %8 = vector.extract_strided_slice %4 {offsets = [0, 1], sizes = [4, 15], strides = [1, 1]} : vector<4x16xbf16> to vector<4x15xbf16>
    %9 = tpu.concatenate %8, %5 in 1 : vector<4x15xbf16>, vector<4x1xbf16> -> vector<4x16xbf16>
    %10 = tpu.concatenate %7, %4, %9 in 0 : vector<4x16xbf16>, vector<4x16xbf16>, vector<4x16xbf16> -> vector<12x16xbf16>
    %c0_4 = arith.constant 0 : index
    %c0_5 = arith.constant 0 : index
    %11 = vector.load %arg1[%c0_4, %c0_5] : memref<8x12xbf16, #tpu.memory_space<vmem>>, vector<8x12xbf16>
    %cst_6 = arith.constant dense<0.000000e+00> : vector<8x16xf32>
    %12 = tpu.matmul %11, %10, %cst_6 {dimension_numbers = #tpu.dot_dimension_numbers<[1], [0], [0], [1], [0, 0, 1, 1], [], []>} : vector<8x12xbf16>, vector<12x16xbf16>, vector<8x16xf32> -> vector<8x16xf32>
    %cst_7 = arith.constant dense<0.000000e+00> : vector<8xf32>
    %13 = vector.multi_reduction <add>, %12, %cst_7 [1] : vector<8x16xf32> to vector<8xf32>
    %14 = vector.shape_cast %13 : vector<8xf32> to vector<8x1xf32>
    %15 = arith.addf %0, %14 : vector<8x1xf32>
    %16 = arith.mulf %12, %12 : vector<8x16xf32>
    %cst_8 = arith.constant dense<0.000000e+00> : vector<8xf32>
    %17 = vector.multi_reduction <add>, %16, %cst_8 [1] : vector<8x16xf32> to vector<8xf32>
    %18 = vector.shape_cast %17 : vector<8xf32> to vector<8x1xf32>
    %19 = arith.addf %1, %18 : vector<8x1xf32>
    %c1 = arith.constant 1 : index
    %c0_9 = arith.constant 0 : index
    %c0_10 = arith.constant 0 : index
    %20 = vector.load %arg0[%c1, %c0_9, %c0_10] : memref<2x4x16xf32, #tpu.memory_space<vmem>>, vector<1x4x16xf32>
    %21 = vector.shape_cast %20 : vector<1x4x16xf32> to vector<4x16xf32>
    %22 = arith.truncf %21 : vector<4x16xf32> to vector<4x16xbf16>
    %cst_11 = arith.constant 0.000000e+00 : bf16
    %23 = vector.broadcast %cst_11 : bf16 to vector<4x1xbf16>
    %24 = vector.extract_strided_slice %22 {offsets = [0, 0], sizes = [4, 15], strides = [1, 1]} : vector<4x16xbf16> to vector<4x15xbf16>
    %25 = tpu.concatenate %23, %24 in 1 : vector<4x1xbf16>, vector<4x15xbf16> -> vector<4x16xbf16>
    %26 = vector.extract_strided_slice %22 {offsets = [0, 1], sizes = [4, 15], strides = [1, 1]} : vector<4x16xbf16> to vector<4x15xbf16>
    %27 = tpu.concatenate %26, %23 in 1 : vector<4x15xbf16>, vector<4x1xbf16> -> vector<4x16xbf16>
    %28 = tpu.concatenate %25, %22, %27 in 0 : vector<4x16xbf16>, vector<4x16xbf16>, vector<4x16xbf16> -> vector<12x16xbf16>
    %c0_12 = arith.constant 0 : index
    %c0_13 = arith.constant 0 : index
    %29 = vector.load %arg1[%c0_12, %c0_13] : memref<8x12xbf16, #tpu.memory_space<vmem>>, vector<8x12xbf16>
    %cst_14 = arith.constant dense<0.000000e+00> : vector<8x16xf32>
    %30 = tpu.matmul %29, %28, %cst_14 {dimension_numbers = #tpu.dot_dimension_numbers<[1], [0], [0], [1], [0, 0, 1, 1], [], []>} : vector<8x12xbf16>, vector<12x16xbf16>, vector<8x16xf32> -> vector<8x16xf32>
    %cst_15 = arith.constant dense<0.000000e+00> : vector<8xf32>
    %31 = vector.multi_reduction <add>, %30, %cst_15 [1] : vector<8x16xf32> to vector<8xf32>
    %32 = vector.shape_cast %31 : vector<8xf32> to vector<8x1xf32>
    %33 = arith.addf %15, %32 : vector<8x1xf32>
    %34 = arith.mulf %30, %30 : vector<8x16xf32>
    %cst_16 = arith.constant dense<0.000000e+00> : vector<8xf32>
    %35 = vector.multi_reduction <add>, %34, %cst_16 [1] : vector<8x16xf32> to vector<8xf32>
    %36 = vector.shape_cast %35 : vector<8xf32> to vector<8x1xf32>
    %37 = arith.addf %19, %36 : vector<8x1xf32>
    %cst_17 = arith.constant 3.125000e-02 : f32
    %38 = vector.broadcast %cst_17 : f32 to vector<8x1xf32>
    %39 = arith.mulf %33, %38 : vector<8x1xf32>
    %cst_18 = arith.constant 3.125000e-02 : f32
    %40 = vector.broadcast %cst_18 : f32 to vector<8x1xf32>
    %41 = arith.mulf %37, %40 : vector<8x1xf32>
    %42 = arith.mulf %39, %39 : vector<8x1xf32>
    %43 = arith.subf %41, %42 : vector<8x1xf32>
    %cst_19 = arith.constant 0.000000e+00 : f32
    %44 = vector.broadcast %cst_19 : f32 to vector<8x1xf32>
    %45 = arith.maximumf %43, %44 : vector<8x1xf32>
    %c0_20 = arith.constant 0 : index
    %c0_21 = arith.constant 0 : index
    %46 = vector.load %arg2[%c0_20, %c0_21] : memref<8x1xf32, #tpu.memory_space<vmem>>, vector<8x1xf32>
    %cst_22 = arith.constant 9.99999974E-6 : f32
    %47 = vector.broadcast %cst_22 : f32 to vector<8x1xf32>
    %48 = arith.addf %45, %47 : vector<8x1xf32>
    %49 = math.rsqrt %48 : vector<8x1xf32>
    %50 = arith.mulf %46, %49 : vector<8x1xf32>
    %c0_23 = arith.constant 0 : index
    %c0_24 = arith.constant 0 : index
    %51 = vector.load %arg3[%c0_23, %c0_24] : memref<8x1xf32, #tpu.memory_space<vmem>>, vector<8x1xf32>
    %52 = arith.mulf %39, %50 : vector<8x1xf32>
    %53 = arith.subf %51, %52 : vector<8x1xf32>
    %54 = vector.broadcast %50 : vector<8x1xf32> to vector<8x16xf32>
    %55 = arith.mulf %12, %54 : vector<8x16xf32>
    %56 = vector.broadcast %53 : vector<8x1xf32> to vector<8x16xf32>
    %57 = arith.addf %55, %56 : vector<8x16xf32>
    %cst_25 = arith.constant 0.000000e+00 : f32
    %58 = vector.broadcast %cst_25 : f32 to vector<8x16xf32>
    %59 = arith.maximumf %57, %58 : vector<8x16xf32>
    %c0_26 = arith.constant 0 : index
    %c0_27 = arith.constant 0 : index
    %c0_28 = arith.constant 0 : index
    %60 = vector.load %arg4[%c0_26, %c0_27, %c0_28] : memref<2x8x16xf32, #tpu.memory_space<vmem>>, vector<1x8x16xf32>
    %61 = vector.shape_cast %60 : vector<1x8x16xf32> to vector<8x16xf32>
    %62 = vector.shape_cast %59 : vector<8x16xf32> to vector<1x8x16xf32>
    tpu.vector_store %arg4[%c0_26, %c0_27, %c0_28], %62 {strides = array<i32>} : memref<2x8x16xf32, #tpu.memory_space<vmem>>, vector<1x8x16xf32>,
    %63 = vector.broadcast %50 : vector<8x1xf32> to vector<8x16xf32>
    %64 = arith.mulf %30, %63 : vector<8x16xf32>
    %65 = vector.broadcast %53 : vector<8x1xf32> to vector<8x16xf32>
    %66 = arith.addf %64, %65 : vector<8x16xf32>
    %cst_29 = arith.constant 0.000000e+00 : f32
    %67 = vector.broadcast %cst_29 : f32 to vector<8x16xf32>
    %68 = arith.maximumf %66, %67 : vector<8x16xf32>
    %c1_30 = arith.constant 1 : index
    %c0_31 = arith.constant 0 : index
    %c0_32 = arith.constant 0 : index
    %69 = vector.load %arg4[%c1_30, %c0_31, %c0_32] : memref<2x8x16xf32, #tpu.memory_space<vmem>>, vector<1x8x16xf32>
    %70 = vector.shape_cast %69 : vector<1x8x16xf32> to vector<8x16xf32>
    %71 = vector.shape_cast %68 : vector<8x16xf32> to vector<1x8x16xf32>
    tpu.vector_store %arg4[%c1_30, %c0_31, %c0_32], %71 {strides = array<i32>} : memref<2x8x16xf32, #tpu.memory_space<vmem>>, vector<1x8x16xf32>,
    return
  }
}

</mosaic_0001>

<llo_original>
// kernel: tpu_custom_call.1
$region0: #{tpu_custom_call.1}
  #allocation0 [shape = 'u32[]', space=smem, size = 0x4, offset = 0x4, fixed_abs, tag = 'smem constant byte address 0x4 - core index']
  #allocation1 [shape = 'u32[144,128]{1,0:T(1,128)}', space=vmem, size = 0x12000, scoped, tag = 'internal scratch']
  %s0 = inlined_call_operand.vmem [shape: f32[2,4,16], index: 0, kind: input, shape index: {}]
  %s1 = inlined_call_operand.vmem [shape: bf16[8,12], index: 1, kind: input, shape index: {}]
  %s2 = inlined_call_operand.vmem [shape: f32[8,1], index: 2, kind: input, shape index: {}]
  %s3 = inlined_call_operand.vmem [shape: f32[8,1], index: 3, kind: input, shape index: {}]
  %s4 = inlined_call_operand.hbm [shape: f32[2,8,16], index: 4, kind: output, shape index: {}]
  %s5 = sld [smem:[#allocation0]]
  $region26: #{tpu_custom_call.1} parent=0
    _
  %s7 = ssub.s32 1, %s5
  %s8 = scalar_select 0, %s7, %s5
  $region1: #{tpu_custom_call.1} parent=0
    #allocation2 [shape = 'u8[8192]{0}', space=vmem, size = 0x2000, scoped, tag = 'output window, operand 0, single buffered']
    #allocation3 [shape = 's32[1]{0}', space=sflag, size = 0x4, scoped, tag = 'scoped memory for tpu_custom_call.1']
    %9 = vsyncpa [#allocation3], 0
    // Predicated region
    $region2: #{tpu_custom_call.1} parent=1 // pred_check
      _
    $region3: #{tpu_custom_call.1} parent=1 // pred_check_branch
      %11 = sbr.rel (0) target = $region5
    $region4: #{tpu_custom_call.1} parent=1 // pred_region
      _
    $region5: #{tpu_custom_call.1} parent=1 // pred_fallthru
      _
    // Predicated region
    $region6: #{tpu_custom_call.1} parent=1 // pred_check
      _
    $region7: #{tpu_custom_call.1} parent=1 // pred_check_branch
      %13 = sbr.rel (0) target = $region9
    $region8: #{tpu_custom_call.1} parent=1 // pred_region
      _
    $region9: #{tpu_custom_call.1} parent=1 // pred_fallthru
      _
    // Predicated region
    $region10: #{tpu_custom_call.1} parent=1 // pred_check
      _
    $region11: #{tpu_custom_call.1} parent=1 // pred_check_branch
      %15 = sbr.rel (0) target = $region13
    $region12: #{tpu_custom_call.1} parent=1 // pred_region
      _
    $region13: #{tpu_custom_call.1} parent=1 // pred_fallthru
      _
    // Predicated region
    $region14: #{tpu_custom_call.1} parent=1 // pred_check
      _
    $region15: #{tpu_custom_call.1} parent=1 // pred_check_branch
      %17 = sbr.rel (0) target = $region17
    $region16: #{tpu_custom_call.1} parent=1 // pred_region
      _
    $region17: #{tpu_custom_call.1} parent=1 // pred_fallthru
      _
    %v19 = vld [vmem:[%s0] sm:$0xf]
    %v20 = vpack.c.bf16 %v19, %v19
    %22 = vrot.lane.b32.xlu0 %v20, 1
    %v23 = vpop.permute.xlu0 %22
    %vm24 = vcmask 7168
    %v27 = vsel %vm24, 0, %v23
    %28 = vrot.lane.b32.xlu0 %v20, 127
    %v29 = vpop.permute.xlu0 %28
    %vm30 = vcmask 121856
    %v32 = vsel %vm30, %v29, 0
    %v33 = vrot.slane %v20, 6
    %v35 = vrot.slane %v32, 4
    %vm36 = vcmask 1041408
    %v38 = vsel %vm36, %v27, %v33
    %vm39 = vcmask 1043456
    %v41 = vsel %vm39, %v38, %v35
    %v42 = vld [vmem:[%s1] sm:$0xf]
    %vm43 = vcmask 97280
    %v45 = vsel %vm43, %v42, 0
    %vm47 = vcmask 1045504
    %v48 = vsel %vm47, %v41, 0
    %50 = vmatprep.subr.bf16.mxu0 0
    %51 = vmatpush1.bf16.msra.mxu0 %v48
    %52 = vmatprep.subr.bf16.mxu0 0
    %53 = vmatpush1.bf16.msra.mxu0 0
    %54 = vmatprep.subr.bf16.mxu0 0
    %55 = vmatpush1.bf16.msra.mxu0 0
    %56 = vmatprep.subr.bf16.mxu0 0
    %57 = vmatpush1.bf16.msra.mxu0 0
    %58 = vmatprep.subr.bf16.mxu0 0
    %59 = vmatpush1.bf16.msra.mxu0 0
    %60 = vmatprep.subr.bf16.mxu0 0
    %61 = vmatpush1.bf16.msra.mxu0 0
    %62 = vmatprep.subr.bf16.mxu0 0
    %63 = vmatpush1.bf16.msra.mxu0 0
    %64 = vmatprep.subr.bf16.mxu0 0
    %65 = vmatpush1.bf16.msra.mxu0 0
    %66 = vmatprep.subr.bf16.mxu0 0
    %67 = vmatpush1.bf16.msra.mxu0 0
    %68 = vmatprep.subr.bf16.mxu0 0
    %69 = vmatpush1.bf16.msra.mxu0 0
    %70 = vmatprep.subr.bf16.mxu0 0
    %71 = vmatpush1.bf16.msra.mxu0 0
    %72 = vmatprep.subr.bf16.mxu0 0
    %73 = vmatpush1.bf16.msra.mxu0 0
    %74 = vmatprep.subr.bf16.mxu0 0
    %75 = vmatpush1.bf16.msra.mxu0 0
    %76 = vmatprep.subr.bf16.mxu0 0
    %77 = vmatpush1.bf16.msra.mxu0 0
    %78 = vmatprep.subr.bf16.mxu0 0
    %79 = vmatpush1.bf16.msra.mxu0 0
    %80 = vmatprep.subr.bf16.mxu0 0
    %81 = vmatpush1.bf16.msra.mxu0 0
    %82 = vmatprep.mubr.bf16.mxu0 0
    %83 = vmatmul.mubr.bf16.gmra.mrb[0].mxu0 %v45
    %v84 = vpop.f32.mrb[0].mxu0
    %v85 = vadd.f32 0.0, %v84
    %v86 = vpop.f32.mrb[0].mxu0
    %v87 = vpop.f32.mrb[0].mxu0
    %v88 = vpop.f32.mrb[0].mxu0
    %89 = vdwg.mxu0
    %vm90 = vcmask 130048
    %v91 = vsel %vm90, %v85, 0.0
    %92 = vadd.xlane.f32.xlu0 %v91
    %v93 = vpop.xlane.xlu0 %92
    %v94 = vadd.f32 %v93, 0.0
    %v95 = vmul.f32 %v85, %v85
    %v96 = vsel %vm90, %v95, 0.0
    %97 = vadd.xlane.f32.xlu0 %v96
    %v98 = vpop.xlane.xlu0 %97
    %v99 = vadd.f32 %v98, 0.0
    %s100 = scalar_lea.vmem %s0, 4
    %v101 = vld [vmem:[%s100] sm:$0xf]
    %v102 = vpack.c.bf16 %v101, %v101
    %104 = vrot.lane.b32.xlu0 %v102, 1
    %v105 = vpop.permute.xlu0 %104
    %v107 = vsel %vm24, 0, %v105
    %108 = vrot.lane.b32.xlu0 %v102, 127
    %v109 = vpop.permute.xlu0 %108
    %v111 = vsel %vm30, %v109, 0
    %v112 = vrot.slane %v102, 6
    %v114 = vrot.slane %v111, 4
    %v116 = vsel %vm36, %v107, %v112
    %v118 = vsel %vm39, %v116, %v114
    %v119 = vsel %vm47, %v118, 0
    %121 = vmatprep.subr.bf16.mxu0 0
    %122 = vmatpush1.bf16.msra.mxu0 %v119
    %123 = vmatprep.subr.bf16.mxu0 0
    %124 = vmatpush1.bf16.msra.mxu0 0
    %125 = vmatprep.subr.bf16.mxu0 0
    %126 = vmatpush1.bf16.msra.mxu0 0
    %127 = vmatprep.subr.bf16.mxu0 0
    %128 = vmatpush1.bf16.msra.mxu0 0
    %129 = vmatprep.subr.bf16.mxu0 0
    %130 = vmatpush1.bf16.msra.mxu0 0
    %131 = vmatprep.subr.bf16.mxu0 0
    %132 = vmatpush1.bf16.msra.mxu0 0
    %133 = vmatprep.subr.bf16.mxu0 0
    %134 = vmatpush1.bf16.msra.mxu0 0
    %135 = vmatprep.subr.bf16.mxu0 0
    %136 = vmatpush1.bf16.msra.mxu0 0
    %137 = vmatprep.subr.bf16.mxu0 0
    %138 = vmatpush1.bf16.msra.mxu0 0
    %139 = vmatprep.subr.bf16.mxu0 0
    %140 = vmatpush1.bf16.msra.mxu0 0
    %141 = vmatprep.subr.bf16.mxu0 0
    %142 = vmatpush1.bf16.msra.mxu0 0
    %143 = vmatprep.subr.bf16.mxu0 0
    %144 = vmatpush1.bf16.msra.mxu0 0
    %145 = vmatprep.subr.bf16.mxu0 0
    %146 = vmatpush1.bf16.msra.mxu0 0
    %147 = vmatprep.subr.bf16.mxu0 0
    %148 = vmatpush1.bf16.msra.mxu0 0
    %149 = vmatprep.subr.bf16.mxu0 0
    %150 = vmatpush1.bf16.msra.mxu0 0
    %151 = vmatprep.subr.bf16.mxu0 0
    %152 = vmatpush1.bf16.msra.mxu0 0
    %153 = vmatprep.mubr.bf16.mxu0 0
    %154 = vmatmul.mubr.bf16.gmra.mrb[0].mxu0 %v45
    %v155 = vpop.f32.mrb[0].mxu0
    %v156 = vadd.f32 0.0, %v155
    %v157 = vpop.f32.mrb[0].mxu0
    %v158 = vpop.f32.mrb[0].mxu0
    %v159 = vpop.f32.mrb[0].mxu0
    %160 = vdwg.mxu0
    %v161 = vsel %vm90, %v156, 0.0
    %162 = vadd.xlane.f32.xlu0 %v161
    %v163 = vpop.xlane.xlu0 %162
    %v164 = vadd.f32 %v94, %v163
    %v165 = vmul.f32 %v156, %v156
    %v166 = vsel %vm90, %v165, 0.0
    %167 = vadd.xlane.f32.xlu0 %v166
    %v168 = vpop.xlane.xlu0 %167
    %v169 = vadd.f32 %v99, %v168
    %v170 = vmul.f32 %v164, 0.03125
    %v171 = vmul.f32 %v169, 0.03125
    %v172 = vmul.f32 %v170, %v170
    %v173 = vsub.f32 %v171, %v172
    %v174 = vmax.f32 %v173, 0.0
    %v175 = vld [vmem:[%s2] sm:$0xff]
    %v176 = vadd.f32 %v174, 1e-05
    %v177 = vrsqrt.pop %v176
    %v178 = vmul.f32 %v175, %v177
    %v179 = vld [vmem:[%s3] sm:$0xff]
    %v180 = vmul.f32 %v170, %v178
    %v181 = vsub.f32 %v179, %v180
    %183 = vset.pattern.permute.xlu0 0
    %184 = vperm.xlu0 %183, %v178
    %v185 = vpop.permute.xlu0 %184
    %v187 = vmul.f32 %v85, %v185
    %189 = vset.pattern.permute.xlu0 0
    %190 = vperm.xlu0 %189, %v181
    %v191 = vpop.permute.xlu0 %190
    %v193 = vadd.f32 %v187, %v191
    %v194 = vmax.f32 %v193, 0.0
    %195 = vst.msk [vmem:[#allocation2] sm:$0xff] %vm90, %v194
    %v196 = vmul.f32 %v156, %v185
    %v197 = vadd.f32 %v196, %v191
    %v198 = vmax.f32 %v197, 0.0
    %s199 = scalar_lea.vmem [#allocation2], 8
    %200 = vst.msk [vmem:[%s199] sm:$0xff] %vm90, %v198
    // Predicated region
    $region18: #{tpu_custom_call.1} parent=1 // pred_check
      _
    $region19: #{tpu_custom_call.1} parent=1 // pred_check_branch
      %202 = sbr.rel (0) target = $region21
    $region20: #{tpu_custom_call.1} parent=1 // pred_region
      %s204 = ssub.s32 256, 256
      %205 = vsyncadd [#allocation3], %s204
      %s206 = sshll.u32 [#allocation2], 4
      %s207 = int_to_ptr.vmem [resolvable:$true] %s206
      %212 = dma.vmem_to_hbm [thread:$0]  %s207, 256, %s4, [#allocation3], 128, 128, 8
    $region21: #{tpu_custom_call.1} parent=1 // pred_fallthru
      _
    // Predicated region
    $region22: #{tpu_custom_call.1} parent=1 // pred_check
      _
    $region23: #{tpu_custom_call.1} parent=1 // pred_check_branch
      %214 = sbr.rel (0) target = $region25
    $region24: #{tpu_custom_call.1} parent=1 // pred_region
      %215 = dma.done [#allocation3], 256
    $region25: #{tpu_custom_call.1} parent=1 // pred_fallthru
      _
    %216 = vsyncpa [#allocation3], 1

</llo_original>
